<compile_context>
chip_gen: v7x
topology: tpu7x:2x2x1
jax: 0.10.0
libtpu: 0.0.40
codegen_flags: <defaults>
</compile_context>

<pallas_src>
import jax
import jax.numpy as jnp
from jax.experimental import pallas as pl
from jax.experimental.pallas import tpu as pltpu


def _round_up(n, m):
    return (n + m - 1) // m * m


def _pack_layout(input_size, hidden_size, output_size):
    """Row offsets of each (transposed) operand inside the packed (rows, 128) array."""
    assert input_size <= 128 and hidden_size <= 128 and output_size <= 128
    H, OUT = hidden_size, output_size
    r_w1 = 0                              # W1^T : (H, IN)
    r_w2 = r_w1 + _round_up(H, 8)         # W2^T : (H, H)
    r_w3 = r_w2 + _round_up(H, 8)         # W3^T : (OUT, H), zero-padded to 8 rows
    r_b1 = r_w3 + _round_up(OUT, 8)       # b1   : (H, 1) column
    r_b2 = r_b1 + _round_up(H, 8)         # b2   : (H, 1) column
    r_b3 = r_b2 + _round_up(H, 8)         # b3   : (OUT, 1) column
    rows = r_b3 + _round_up(OUT, 8)
    return dict(r_w1=r_w1, r_w2=r_w2, r_w3=r_w3,
                r_b1=r_b1, r_b2=r_b2, r_b3=r_b3,
                rows=rows, lanes=128)


def _pack_params(params, layout):
    """Pack transposed w1/w2/w3 and column biases into one (rows, 128) f32 array."""
    w1, b1, w2, b2, w3, b3 = params
    IN, H = w1.shape
    OUT = w3.shape[1]
    L = layout
    packed = jnp.zeros((L["rows"], L["lanes"]), jnp.float32)
    packed = packed.at[L["r_w1"]:L["r_w1"] + H, :IN].set(w1.T)
    packed = packed.at[L["r_w2"]:L["r_w2"] + H, :H].set(w2.T)
    packed = packed.at[L["r_w3"]:L["r_w3"] + OUT, :H].set(w3.T)
    packed = packed.at[L["r_b1"]:L["r_b1"] + H, 0:1].set(b1.reshape(H, 1))
    packed = packed.at[L["r_b2"]:L["r_b2"] + H, 0:1].set(b2.reshape(H, 1))
    packed = packed.at[L["r_b3"]:L["r_b3"] + OUT, 0:1].set(b3.reshape(OUT, 1))
    return packed


def _make_kernel(input_size, hidden_size, output_size, layout):
    IN, H, OUT = input_size, hidden_size, output_size
    W3_ROWS = _round_up(OUT, 8)   # zero-padded rows keep the head's MXU LHS 8-aligned
    L = layout

    def kernel(xt_ref, p_ref, ot_ref):
        xt = xt_ref[...]                                   # (IN, TB)  lane-dense
        # Static slices of the VMEM-resident packed params (cheap views).
        w1t = p_ref[L["r_w1"]:L["r_w1"] + H, 0:IN]         # (H, IN)
        w2t = p_ref[L["r_w2"]:L["r_w2"] + H, 0:H]          # (H, H)
        w3t = p_ref[L["r_w3"]:L["r_w3"] + W3_ROWS, 0:H]    # (W3_ROWS, H)
        b1 = p_ref[L["r_b1"]:L["r_b1"] + H, 0:1]           # (H, 1) -> lane-broadcast
        b2 = p_ref[L["r_b2"]:L["r_b2"] + H, 0:1]           # (H, 1)
        b3 = p_ref[L["r_b3"]:L["r_b3"] + OUT, 0:1]         # (OUT, 1)

        h1 = jnp.dot(w1t, xt, preferred_element_type=jnp.float32) + b1   # (H, TB)
        h1 = jnp.maximum(h1, 0.0)
        h2 = jnp.dot(w2t, h1, preferred_element_type=jnp.float32) + b2   # (H, TB)
        h2 = jnp.maximum(h2, 0.0)
        # Head: (W3_ROWS, H) @ (H, TB) -> lane-dense rows; padded rows are zeros.
        yt = jnp.dot(w3t, h2, preferred_element_type=jnp.float32)        # (W3_ROWS, TB)
        out = yt[0:OUT, :] + b3                                          # (OUT, TB)
        ot_ref[...] = out.astype(ot_ref.dtype)

    return kernel


def mlp_forward(x, params, *, block_rows=4096):
    """Pallas TPU forward pass.  x: (B, input_size) f32 -> (B, output_size)."""
    w1, b1, w2, b2, w3, b3 = params
    B, IN = x.shape
    H = w1.shape[1]
    OUT = w3.shape[1]

    layout = _pack_layout(IN, H, OUT)
    packed = _pack_params(params, layout)

    # Batch tile: a multiple of 128 lanes, capped at the (128-aligned) batch.
    TB = min(_round_up(max(block_rows, 128), 128), _round_up(B, 128))
    B_pad = _round_up(B, TB)
    n_tiles = B_pad // TB

    # Present x batch-on-lanes: (IN, B_pad).  Tiny relayout of a (B, IN) array that
    # makes every per-tile DMA and in-kernel vreg fully lane-dense.
    xt = x.T
    if B_pad != B:
        xt = jnp.pad(xt, ((0, 0), (0, B_pad - B)))

    kernel = _make_kernel(IN, H, OUT, layout)

    out_t = pl.pallas_call(
        kernel,
        out_shape=jax.ShapeDtypeStruct((OUT, B_pad), x.dtype),
        grid=(n_tiles,),
        in_specs=[
            # x^T tile marches along the batch (lane) axis; double-buffered by Pallas.
            pl.BlockSpec((IN, TB), lambda i: (0, i)),
            # Packed params: constant block index -> fetched once, VMEM-resident.
            pl.BlockSpec(packed.shape, lambda i: (0, 0)),
        ],
        out_specs=pl.BlockSpec((OUT, TB), lambda i: (0, i)),
        compiler_params=pltpu.CompilerParams(
            dimension_semantics=("parallel",),
        ),
    )(xt, packed)

    # Back to the PyTorch (B, OUT) convention; padded garbage columns are dropped.
    return out_t[:, :B].T


def init_params(key, input_size=6, hidden_size=32, output_size=1):
    """Deterministic init mimicking PyTorch nn.Linear default (uniform +/-1/sqrt(fan_in))."""
    def linear_init(k, fan_in, fan_out):
        k_w, k_b = jax.random.split(k)
        bound = 1.0 / jnp.sqrt(fan_in)
        w = jax.random.uniform(k_w, (fan_in, fan_out), jnp.float32, -bound, bound)
        b = jax.random.uniform(k_b, (1, fan_out), jnp.float32, -bound, bound)
        return w, b

    k1, k2, k3 = jax.random.split(key, 3)
    w1, b1 = linear_init(k1, input_size, hidden_size)
    w2, b2 = linear_init(k2, hidden_size, hidden_size)
    w3, b3 = linear_init(k3, hidden_size, output_size)
    return (w1, b1, w2, b2, w3, b3)


def mlp_reference(x, params):
    """Plain-JAX reference for sanity checking."""
    w1, b1, w2, b2, w3, b3 = params
    h1 = jnp.maximum(x @ w1 + b1, 0.0)
    h2 = jnp.maximum(h1 @ w2 + b2, 0.0)
    return h2 @ w3 + b3


if __name__ == "__main__":
    key = jax.random.PRNGKey(0)
    k_params, k_x1, k_x2 = jax.random.split(key, 3)

    input_size, hidden_size, output_size = 6, 32, 1
    params = init_params(k_params, input_size, hidden_size, output_size)

    # Small smoke test (single tile; batch is padded up to one 128-lane tile).
    x_small = jax.random.normal(k_x1, (8, input_size), jnp.float32)
    out_small = jax.block_until_ready(mlp_forward(x_small, params))
    ref_small = mlp_reference(x_small, params)
    assert out_small.shape == (8, output_size), out_small.shape
    assert jnp.allclose(out_small, ref_small, atol=1e-5, rtol=1e-5), "small-batch mismatch"

    # Multi-tile test: exercises the batch grid, padding, and pipelined x/out DMAs.
    x_big = jax.random.normal(k_x2, (300, input_size), jnp.float32)
    out_big = jax.block_until_ready(mlp_forward(x_big, params, block_rows=128))
    ref_big = mlp_reference(x_big, params)
    assert out_big.shape == (300, output_size), out_big.shape
    assert jnp.allclose(out_big, ref_big, atol=1e-5, rtol=1e-5), "multi-tile mismatch"

    print("KERNEL_OK")
</pallas_src>

<mosaic_0001>
module attributes {stable_mosaic.version = 11 : i64} {
  func.func @kernel(%arg0: i32, %arg1: memref<6x128xf32, #tpu.memory_space<vmem>>, %arg2: memref<144x128xf32, #tpu.memory_space<vmem>>, %arg3: memref<1x128xf32, #tpu.memory_space<vmem>>) attributes {dimension_semantics = [#tpu.dimension_semantics<parallel>], iteration_bounds = array<i64: 1>, scalar_prefetch = 0 : i64, scratch_operands = 0 : i64, tpu.core_type = #tpu.core_type<tc>, window_params = [{transform_indices = @transform_0, window_bounds = array<i64: 6, 128>}, {pipeline_mode = #tpu.pipeline_mode<synchronous>, transform_indices = @transform_1, window_bounds = array<i64: 144, 128>}, {transform_indices = @transform_2, window_bounds = array<i64: 1, 128>}]} {
    %c0 = arith.constant 0 : index
    %c0_0 = arith.constant 0 : index
    %0 = vector.load %arg1[%c0, %c0_0] : memref<6x128xf32, #tpu.memory_space<vmem>>, vector<6x128xf32>
    %c0_1 = arith.constant 0 : index
    %c0_2 = arith.constant 0 : index
    %1 = vector.load %arg2[%c0_1, %c0_2] : memref<144x128xf32, #tpu.memory_space<vmem>>, vector<32x6xf32>
    %c32 = arith.constant 32 : index
    %c0_3 = arith.constant 0 : index
    %2 = vector.load %arg2[%c32, %c0_3] : memref<144x128xf32, #tpu.memory_space<vmem>>, vector<32x32xf32>
    %c64 = arith.constant 64 : index
    %c0_4 = arith.constant 0 : index
    %3 = vector.load %arg2[%c64, %c0_4] : memref<144x128xf32, #tpu.memory_space<vmem>>, vector<8x32xf32>
    %c72 = arith.constant 72 : index
    %c0_5 = arith.constant 0 : index
    %4 = vector.load %arg2[%c72, %c0_5] : memref<144x128xf32, #tpu.memory_space<vmem>>, vector<32x1xf32>
    %c104 = arith.constant 104 : index
    %c0_6 = arith.constant 0 : index
    %5 = vector.load %arg2[%c104, %c0_6] : memref<144x128xf32, #tpu.memory_space<vmem>>, vector<32x1xf32>
    %c136 = arith.constant 136 : index
    %c0_7 = arith.constant 0 : index
    %6 = vector.load %arg2[%c136, %c0_7] : memref<144x128xf32, #tpu.memory_space<vmem>>, vector<1x1xf32>
    %cst = arith.constant dense<0.000000e+00> : vector<32x128xf32>
    %7 = tpu.matmul %1, %0, %cst {dimension_numbers = #tpu.dot_dimension_numbers<[1], [0], [0], [1], [0, 0, 1, 1], [], []>} : vector<32x6xf32>, vector<6x128xf32>, vector<32x128xf32> -> vector<32x128xf32>
    %8 = vector.broadcast %4 : vector<32x1xf32> to vector<32x128xf32>
    %9 = arith.addf %7, %8 : vector<32x128xf32>
    %cst_8 = arith.constant 0.000000e+00 : f32
    %10 = vector.broadcast %cst_8 : f32 to vector<32x128xf32>
    %11 = arith.maximumf %9, %10 : vector<32x128xf32>
    %cst_9 = arith.constant dense<0.000000e+00> : vector<32x128xf32>
    %12 = tpu.matmul %2, %11, %cst_9 {dimension_numbers = #tpu.dot_dimension_numbers<[1], [0], [0], [1], [0, 0, 1, 1], [], []>} : vector<32x32xf32>, vector<32x128xf32>, vector<32x128xf32> -> vector<32x128xf32>
    %13 = vector.broadcast %5 : vector<32x1xf32> to vector<32x128xf32>
    %14 = arith.addf %12, %13 : vector<32x128xf32>
    %cst_10 = arith.constant 0.000000e+00 : f32
    %15 = vector.broadcast %cst_10 : f32 to vector<32x128xf32>
    %16 = arith.maximumf %14, %15 : vector<32x128xf32>
    %cst_11 = arith.constant dense<0.000000e+00> : vector<8x128xf32>
    %17 = tpu.matmul %3, %16, %cst_11 {dimension_numbers = #tpu.dot_dimension_numbers<[1], [0], [0], [1], [0, 0, 1, 1], [], []>} : vector<8x32xf32>, vector<32x128xf32>, vector<8x128xf32> -> vector<8x128xf32>
    %18 = vector.extract_strided_slice %17 {offsets = [0, 0], sizes = [1, 128], strides = [1, 1]} : vector<8x128xf32> to vector<1x128xf32>
    %19 = vector.broadcast %6 : vector<1x1xf32> to vector<1x128xf32>
    %20 = arith.addf %18, %19 : vector<1x128xf32>
    %c0_12 = arith.constant 0 : index
    %c0_13 = arith.constant 0 : index
    %21 = vector.load %arg3[%c0_12, %c0_13] : memref<1x128xf32, #tpu.memory_space<vmem>>, vector<1x128xf32>
    tpu.vector_store %arg3[%c0_12, %c0_13], %20 {strides = array<i32>} : memref<1x128xf32, #tpu.memory_space<vmem>>, vector<1x128xf32>,
    return
  }
  func.func @transform_0(%arg0: i32) -> (i32, i32) {
    %c0_i32 = arith.constant 0 : i32
    %c0_i32_0 = arith.constant 0 : i32
    return %c0_i32, %arg0 : i32, i32
  }
  func.func @transform_1(%arg0: i32) -> (i32, i32) {
    %c0_i32 = arith.constant 0 : i32
    %c0_i32_0 = arith.constant 0 : i32
    %c0_i32_1 = arith.constant 0 : i32
    return %c0_i32, %c0_i32_0 : i32, i32
  }
  func.func @transform_2(%arg0: i32) -> (i32, i32) {
    %c0_i32 = arith.constant 0 : i32
    %c0_i32_0 = arith.constant 0 : i32
    return %c0_i32, %arg0 : i32, i32
  }
}

</mosaic_0001>

<llo_original>
// kernel: tpu_custom_call.1
$region0: #{tpu_custom_call.1}
  #allocation0 [shape = 'u32[]', space=smem, size = 0x4, offset = 0x4, fixed_abs, tag = 'smem constant byte address 0x4 - core index']
  #allocation1 [shape = 'u32[144,128]{1,0:T(1,128)}', space=vmem, size = 0x12000, scoped, tag = 'internal scratch']
  %s0 = inlined_call_operand.hbm [shape: f32[6,128], index: 0, kind: input, shape index: {}]
  %s1 = inlined_call_operand.hbm [shape: f32[144,128], index: 1, kind: input, shape index: {}]
  %s2 = inlined_call_operand.hbm [shape: f32[1,128], index: 2, kind: output, shape index: {}]
  %s3 = sld [smem:[#allocation0]]
  $region26: #{tpu_custom_call.1} parent=0
    _
  %s5 = ssub.s32 1, %s3
  %s6 = scalar_select 0, %s5, %s3
  $region1: #{tpu_custom_call.1} parent=0
    #allocation2 [shape = 'u8[4096]{0}', space=vmem, size = 0x1000, scoped, tag = 'input window, operand 0, single buffered']
    #allocation3 [shape = 's32[1]{0}', space=sflag, size = 0x4, scoped, tag = 'scoped memory for tpu_custom_call.1']
    #allocation4 [shape = 's32[1]{0}', space=sflag, size = 0x4, scoped, tag = 'scoped memory for tpu_custom_call.1']
    #allocation5 [shape = 'u8[73728]{0}', space=vmem, size = 0x12000, scoped, tag = 'input window, operand 1, single buffered']
    #allocation6 [shape = 's32[1]{0}', space=sflag, size = 0x4, scoped, tag = 'scoped memory for tpu_custom_call.1']
    #allocation7 [shape = 'u8[512]{0}', space=vmem, size = 0x400, scoped, tag = 'output window, operand 0, single buffered']
    %7 = vsyncpa [#allocation3], 0
    %8 = vsyncpa [#allocation6], 0
    %9 = vsyncpa [#allocation4], 0
    // Predicated region
    $region2: #{tpu_custom_call.1} parent=1 // pred_check
      _
    $region3: #{tpu_custom_call.1} parent=1 // pred_check_branch
      %11 = sbr.rel (0) target = $region5
    $region4: #{tpu_custom_call.1} parent=1 // pred_region
      %s13 = ssub.s32 128, 128
      %14 = vsyncadd [#allocation3], %s13
      %s16 = sshll.u32 [#allocation2], 4
      %s17 = int_to_ptr.vmem [resolvable:$true] %s16
      %19 = dma.hbm_to_vmem [thread:$0]  %s0, 128, %s17, [#allocation3]
    $region5: #{tpu_custom_call.1} parent=1 // pred_fallthru
      _
    // Predicated region
    $region6: #{tpu_custom_call.1} parent=1 // pred_check
      _
    $region7: #{tpu_custom_call.1} parent=1 // pred_check_branch
      %21 = sbr.rel (0) target = $region9
    $region8: #{tpu_custom_call.1} parent=1 // pred_region
      %s23 = ssub.s32 2304, 2304
      %24 = vsyncadd [#allocation6], %s23
      %s25 = sshll.u32 [#allocation5], 4
      %s26 = int_to_ptr.vmem [resolvable:$true] %s25
      %31 = dma.hbm_to_vmem [thread:$0]  %s1, 2304, %s26, [#allocation6], 128, 128, 8
    $region9: #{tpu_custom_call.1} parent=1 // pred_fallthru
      _
    // Predicated region
    $region10: #{tpu_custom_call.1} parent=1 // pred_check
      _
    $region11: #{tpu_custom_call.1} parent=1 // pred_check_branch
      %33 = sbr.rel (0) target = $region13
    $region12: #{tpu_custom_call.1} parent=1 // pred_region
      %34 = dma.done [#allocation3], 128
    $region13: #{tpu_custom_call.1} parent=1 // pred_fallthru
      _
    // Predicated region
    $region14: #{tpu_custom_call.1} parent=1 // pred_check
      _
    $region15: #{tpu_custom_call.1} parent=1 // pred_check_branch
      %36 = sbr.rel (0) target = $region17
    $region16: #{tpu_custom_call.1} parent=1 // pred_region
      %37 = dma.done [#allocation6], 2304
    $region17: #{tpu_custom_call.1} parent=1 // pred_fallthru
      _
    %v38 = vld [vmem:[#allocation2] sm:$0x3f]
    %v39 = vld [vmem:[#allocation5] sm:$0xff]
    %v40 = vld [vmem:[#allocation5 + $0x8] sm:$0xff]
    %v41 = vld [vmem:[#allocation5 + $0x10] sm:$0xff]
    %v42 = vld [vmem:[#allocation5 + $0x18] sm:$0xff]
    %v43 = vld [vmem:[#allocation5 + $0x20] sm:$0xff]
    %v44 = vld [vmem:[#allocation5 + $0x28] sm:$0xff]
    %v45 = vld [vmem:[#allocation5 + $0x30] sm:$0xff]
    %v46 = vld [vmem:[#allocation5 + $0x38] sm:$0xff]
    %v47 = vld [vmem:[#allocation5 + $0x40] sm:$0xff]
    %v48 = vld [vmem:[#allocation5 + $0x48] sm:$0xff]
    %v49 = vld [vmem:[#allocation5 + $0x50] sm:$0xff]
    %v50 = vld [vmem:[#allocation5 + $0x58] sm:$0xff]
    %v51 = vld [vmem:[#allocation5 + $0x60] sm:$0xff]
    %v52 = vld [vmem:[#allocation5 + $0x68] sm:$0xff]
    %v53 = vld [vmem:[#allocation5 + $0x70] sm:$0xff]
    %v54 = vld [vmem:[#allocation5 + $0x78] sm:$0xff]
    %v55 = vld [vmem:[#allocation5 + $0x80] sm:$0xff]
    %v56 = vld [vmem:[#allocation5 + $0x88] sm:$0x1]
    %58 = vset.pattern.permute.xlu0 0
    %59 = vperm.xlu0 %58, %v48
    %v60 = vpop.permute.xlu0 %59
    %63 = vset.pattern.permute.xlu0 0
    %64 = vperm.xlu0 %63, %v49
    %v65 = vpop.permute.xlu0 %64
    %68 = vset.pattern.permute.xlu0 0
    %69 = vperm.xlu0 %68, %v50
    %v70 = vpop.permute.xlu0 %69
    %73 = vset.pattern.permute.xlu0 0
    %74 = vperm.xlu0 %73, %v51
    %v75 = vpop.permute.xlu0 %74
    %vm77 = vcmask 48128
    %v79 = vsel %vm77, %v39, 0
    %v82 = vsel %vm77, %v40, 0
    %v85 = vsel %vm77, %v41, 0
    %v88 = vsel %vm77, %v42, 0
    %vm90 = vcmask 1045504
    %v92 = vsel %vm90, %v38, 0
    %94 = vmatprep.subr.mxu0 0.0
    %95 = vmatpush1.msra.mxu0 %v92
    %96 = vmatprep.subr.mxu0 0.0
    %97 = vmatpush1.msra.mxu0 0.0
    %98 = vmatprep.subr.mxu0 0.0
    %99 = vmatpush1.msra.mxu0 0.0
    %100 = vmatprep.subr.mxu0 0.0
    %101 = vmatpush1.msra.mxu0 0.0
    %102 = vmatprep.subr.mxu0 0.0
    %103 = vmatpush1.msra.mxu0 0.0
    %104 = vmatprep.subr.mxu0 0.0
    %105 = vmatpush1.msra.mxu0 0.0
    %106 = vmatprep.subr.mxu0 0.0
    %107 = vmatpush1.msra.mxu0 0.0
    %108 = vmatprep.subr.mxu0 0.0
    %109 = vmatpush1.msra.mxu0 0.0
    %110 = vmatprep.subr.mxu0 0.0
    %111 = vmatpush1.msra.mxu0 0.0
    %112 = vmatprep.subr.mxu0 0.0
    %113 = vmatpush1.msra.mxu0 0.0
    %114 = vmatprep.subr.mxu0 0.0
    %115 = vmatpush1.msra.mxu0 0.0
    %116 = vmatprep.subr.mxu0 0.0
    %117 = vmatpush1.msra.mxu0 0.0
    %118 = vmatprep.subr.mxu0 0.0
    %119 = vmatpush1.msra.mxu0 0.0
    %120 = vmatprep.subr.mxu0 0.0
    %121 = vmatpush1.msra.mxu0 0.0
    %122 = vmatprep.subr.mxu0 0.0
    %123 = vmatpush1.msra.mxu0 0.0
    %124 = vmatprep.subr.mxu0 0.0
    %125 = vmatpush1.msra.mxu0 0.0
    %126 = vmatprep.subr.mxu0 0.0
    %127 = vmatpush1.msra.mxu0 0.0
    %128 = vmatprep.subr.mxu0 0.0
    %129 = vmatpush1.msra.mxu0 0.0
    %130 = vmatprep.subr.mxu0 0.0
    %131 = vmatpush1.msra.mxu0 0.0
    %132 = vmatprep.subr.mxu0 0.0
    %133 = vmatpush1.msra.mxu0 0.0
    %134 = vmatprep.subr.mxu0 0.0
    %135 = vmatpush1.msra.mxu0 0.0
    %136 = vmatprep.subr.mxu0 0.0
    %137 = vmatpush1.msra.mxu0 0.0
    %138 = vmatprep.subr.mxu0 0.0
    %139 = vmatpush1.msra.mxu0 0.0
    %140 = vmatprep.subr.mxu0 0.0
    %141 = vmatpush1.msra.mxu0 0.0
    %142 = vmatprep.subr.mxu0 0.0
    %143 = vmatpush1.msra.mxu0 0.0
    %144 = vmatprep.subr.mxu0 0.0
    %145 = vmatpush1.msra.mxu0 0.0
    %146 = vmatprep.subr.mxu0 0.0
    %147 = vmatpush1.msra.mxu0 0.0
    %148 = vmatprep.subr.mxu0 0.0
    %149 = vmatpush1.msra.mxu0 0.0
    %150 = vmatprep.subr.mxu0 0.0
    %151 = vmatpush1.msra.mxu0 0.0
    %152 = vmatprep.subr.mxu0 0.0
    %153 = vmatpush1.msra.mxu0 0.0
    %154 = vmatprep.subr.mxu0 0.0
    %155 = vmatpush1.msra.mxu0 0.0
    %156 = vmatprep.subr.mxu0 0.0
    %157 = vmatpush1.msra.mxu0 0.0
    %158 = vmatprep.mubr.f32.mxu0 0.0
    %159 = vmatmul.mubr.f32.gmra.mrb[0].mxu0 %v79
    %v160 = vpop.f32.mrb[0].mxu0
    %v161 = vadd.f32 %v60, %v160
    %v162 = vpop.f32.mrb[0].mxu0
    %163 = vmatprep.mubr.f32.mxu0 0.0
    %164 = vmatmul.mubr.f32.gmra.mrb[0].mxu0 %v82
    %v165 = vpop.f32.mrb[0].mxu0
    %v166 = vadd.f32 %v65, %v165
    %v167 = vpop.f32.mrb[0].mxu0
    %168 = vmatprep.mubr.f32.mxu0 0.0
    %169 = vmatmul.mubr.f32.gmra.mrb[0].mxu0 %v85
    %v170 = vpop.f32.mrb[0].mxu0
    %v171 = vadd.f32 %v70, %v170
    %v172 = vpop.f32.mrb[0].mxu0
    %173 = vmatprep.mubr.f32.mxu0 0.0
    %174 = vmatmul.mubr.f32.gmra.mrb[0].mxu0 %v88
    %v175 = vpop.f32.mrb[0].mxu0
    %v176 = vadd.f32 %v75, %v175
    %v177 = vpop.f32.mrb[0].mxu0
    %178 = vdwg.mxu0
    %v179 = vmax.f32 %v161, 0.0
    %v180 = vmax.f32 %v166, 0.0
    %v181 = vmax.f32 %v171, 0.0
    %v182 = vmax.f32 %v176, 0.0
    %184 = vset.pattern.permute.xlu0 0
    %185 = vperm.xlu0 %184, %v52
    %v186 = vpop.permute.xlu0 %185
    %189 = vset.pattern.permute.xlu0 0
    %190 = vperm.xlu0 %189, %v53
    %v191 = vpop.permute.xlu0 %190
    %194 = vset.pattern.permute.xlu0 0
    %195 = vperm.xlu0 %194, %v54
    %v196 = vpop.permute.xlu0 %195
    %199 = vset.pattern.permute.xlu0 0
    %200 = vperm.xlu0 %199, %v55
    %v201 = vpop.permute.xlu0 %200
    %vm203 = vcmask 261120
    %v205 = vsel %vm203, %v43, 0
    %v208 = vsel %vm203, %v44, 0
    %v211 = vsel %vm203, %v45, 0
    %v214 = vsel %vm203, %v46, 0
    %216 = vmatprep.subr.mxu0 0.0
    %217 = vmatpush1.msra.mxu0 %v179
    %218 = vmatprep.subr.mxu0 0.0
    %219 = vmatpush1.msra.mxu0 %v180
    %220 = vmatprep.subr.mxu0 0.0
    %221 = vmatpush1.msra.mxu0 %v181
    %222 = vmatprep.subr.mxu0 0.0
    %223 = vmatpush1.msra.mxu0 %v182
    %224 = vmatprep.subr.mxu0 0.0
    %225 = vmatpush1.msra.mxu0 0.0
    %226 = vmatprep.subr.mxu0 0.0
    %227 = vmatpush1.msra.mxu0 0.0
    %228 = vmatprep.subr.mxu0 0.0
    %229 = vmatpush1.msra.mxu0 0.0
    %230 = vmatprep.subr.mxu0 0.0
    %231 = vmatpush1.msra.mxu0 0.0
    %232 = vmatprep.subr.mxu0 0.0
    %233 = vmatpush1.msra.mxu0 0.0
    %234 = vmatprep.subr.mxu0 0.0
    %235 = vmatpush1.msra.mxu0 0.0
    %236 = vmatprep.subr.mxu0 0.0
    %237 = vmatpush1.msra.mxu0 0.0
    %238 = vmatprep.subr.mxu0 0.0
    %239 = vmatpush1.msra.mxu0 0.0
    %240 = vmatprep.subr.mxu0 0.0
    %241 = vmatpush1.msra.mxu0 0.0
    %242 = vmatprep.subr.mxu0 0.0
    %243 = vmatpush1.msra.mxu0 0.0
    %244 = vmatprep.subr.mxu0 0.0
    %245 = vmatpush1.msra.mxu0 0.0
    %246 = vmatprep.subr.mxu0 0.0
    %247 = vmatpush1.msra.mxu0 0.0
    %248 = vmatprep.subr.mxu0 0.0
    %249 = vmatpush1.msra.mxu0 0.0
    %250 = vmatprep.subr.mxu0 0.0
    %251 = vmatpush1.msra.mxu0 0.0
    %252 = vmatprep.subr.mxu0 0.0
    %253 = vmatpush1.msra.mxu0 0.0
    %254 = vmatprep.subr.mxu0 0.0
    %255 = vmatpush1.msra.mxu0 0.0
    %256 = vmatprep.subr.mxu0 0.0
    %257 = vmatpush1.msra.mxu0 0.0
    %258 = vmatprep.subr.mxu0 0.0
    %259 = vmatpush1.msra.mxu0 0.0
    %260 = vmatprep.subr.mxu0 0.0
    %261 = vmatpush1.msra.mxu0 0.0
    %262 = vmatprep.subr.mxu0 0.0
    %263 = vmatpush1.msra.mxu0 0.0
    %264 = vmatprep.subr.mxu0 0.0
    %265 = vmatpush1.msra.mxu0 0.0
    %266 = vmatprep.subr.mxu0 0.0
    %267 = vmatpush1.msra.mxu0 0.0
    %268 = vmatprep.subr.mxu0 0.0
    %269 = vmatpush1.msra.mxu0 0.0
    %270 = vmatprep.subr.mxu0 0.0
    %271 = vmatpush1.msra.mxu0 0.0
    %272 = vmatprep.subr.mxu0 0.0
    %273 = vmatpush1.msra.mxu0 0.0
    %274 = vmatprep.subr.mxu0 0.0
    %275 = vmatpush1.msra.mxu0 0.0
    %276 = vmatprep.subr.mxu0 0.0
    %277 = vmatpush1.msra.mxu0 0.0
    %278 = vmatprep.subr.mxu0 0.0
    %279 = vmatpush1.msra.mxu0 0.0
    %280 = vmatprep.mubr.f32.mxu0 0.0
    %281 = vmatmul.mubr.f32.gmra.mrb[0].mxu0 %v205
    %v282 = vpop.f32.mrb[0].mxu0
    %v283 = vadd.f32 %v186, %v282
    %v284 = vpop.f32.mrb[0].mxu0
    %285 = vmatprep.mubr.f32.mxu0 0.0
    %286 = vmatmul.mubr.f32.gmra.mrb[0].mxu0 %v208
    %v287 = vpop.f32.mrb[0].mxu0
    %v288 = vadd.f32 %v191, %v287
    %v289 = vpop.f32.mrb[0].mxu0
    %290 = vmatprep.mubr.f32.mxu0 0.0
    %291 = vmatmul.mubr.f32.gmra.mrb[0].mxu0 %v211
    %v292 = vpop.f32.mrb[0].mxu0
    %v293 = vadd.f32 %v196, %v292
    %v294 = vpop.f32.mrb[0].mxu0
    %295 = vmatprep.mubr.f32.mxu0 0.0
    %296 = vmatmul.mubr.f32.gmra.mrb[0].mxu0 %v214
    %v297 = vpop.f32.mrb[0].mxu0
    %v298 = vadd.f32 %v201, %v297
    %v299 = vpop.f32.mrb[0].mxu0
    %300 = vdwg.mxu0
    %v301 = vmax.f32 %v283, 0.0
    %v302 = vmax.f32 %v288, 0.0
    %v303 = vmax.f32 %v293, 0.0
    %v304 = vmax.f32 %v298, 0.0
    %v306 = vsel %vm203, %v47, 0
    %308 = vmatprep.subr.mxu0 0.0
    %309 = vmatpush1.msra.mxu0 %v301
    %310 = vmatprep.subr.mxu0 0.0
    %311 = vmatpush1.msra.mxu0 %v302
    %312 = vmatprep.subr.mxu0 0.0
    %313 = vmatpush1.msra.mxu0 %v303
    %314 = vmatprep.subr.mxu0 0.0
    %315 = vmatpush1.msra.mxu0 %v304
    %316 = vmatprep.subr.mxu0 0.0
    %317 = vmatpush1.msra.mxu0 0.0
    %318 = vmatprep.subr.mxu0 0.0
    %319 = vmatpush1.msra.mxu0 0.0
    %320 = vmatprep.subr.mxu0 0.0
    %321 = vmatpush1.msra.mxu0 0.0
    %322 = vmatprep.subr.mxu0 0.0
    %323 = vmatpush1.msra.mxu0 0.0
    %324 = vmatprep.subr.mxu0 0.0
    %325 = vmatpush1.msra.mxu0 0.0
    %326 = vmatprep.subr.mxu0 0.0
    %327 = vmatpush1.msra.mxu0 0.0
    %328 = vmatprep.subr.mxu0 0.0
    %329 = vmatpush1.msra.mxu0 0.0
    %330 = vmatprep.subr.mxu0 0.0
    %331 = vmatpush1.msra.mxu0 0.0
    %332 = vmatprep.subr.mxu0 0.0
    %333 = vmatpush1.msra.mxu0 0.0
    %334 = vmatprep.subr.mxu0 0.0
    %335 = vmatpush1.msra.mxu0 0.0
    %336 = vmatprep.subr.mxu0 0.0
    %337 = vmatpush1.msra.mxu0 0.0
    %338 = vmatprep.subr.mxu0 0.0
    %339 = vmatpush1.msra.mxu0 0.0
    %340 = vmatprep.subr.mxu0 0.0
    %341 = vmatpush1.msra.mxu0 0.0
    %342 = vmatprep.subr.mxu0 0.0
    %343 = vmatpush1.msra.mxu0 0.0
    %344 = vmatprep.subr.mxu0 0.0
    %345 = vmatpush1.msra.mxu0 0.0
    %346 = vmatprep.subr.mxu0 0.0
    %347 = vmatpush1.msra.mxu0 0.0
    %348 = vmatprep.subr.mxu0 0.0
    %349 = vmatpush1.msra.mxu0 0.0
    %350 = vmatprep.subr.mxu0 0.0
    %351 = vmatpush1.msra.mxu0 0.0
    %352 = vmatprep.subr.mxu0 0.0
    %353 = vmatpush1.msra.mxu0 0.0
    %354 = vmatprep.subr.mxu0 0.0
    %355 = vmatpush1.msra.mxu0 0.0
    %356 = vmatprep.subr.mxu0 0.0
    %357 = vmatpush1.msra.mxu0 0.0
    %358 = vmatprep.subr.mxu0 0.0
    %359 = vmatpush1.msra.mxu0 0.0
    %360 = vmatprep.subr.mxu0 0.0
    %361 = vmatpush1.msra.mxu0 0.0
    %362 = vmatprep.subr.mxu0 0.0
    %363 = vmatpush1.msra.mxu0 0.0
    %364 = vmatprep.subr.mxu0 0.0
    %365 = vmatpush1.msra.mxu0 0.0
    %366 = vmatprep.subr.mxu0 0.0
    %367 = vmatpush1.msra.mxu0 0.0
    %368 = vmatprep.subr.mxu0 0.0
    %369 = vmatpush1.msra.mxu0 0.0
    %370 = vmatprep.subr.mxu0 0.0
    %371 = vmatpush1.msra.mxu0 0.0
    %372 = vmatprep.mubr.f32.mxu0 0.0
    %373 = vmatmul.mubr.f32.gmra.mrb[0].mxu0 %v306
    %v374 = vpop.f32.mrb[0].mxu0
    %v375 = vadd.f32 0.0, %v374
    %v376 = vpop.f32.mrb[0].mxu0
    %377 = vdwg.mxu0
    %379 = vset.pattern.permute.xlu0 0
    %380 = vperm.xlu0 %379, %v56
    %v381 = vpop.permute.xlu0 %380
    %v383 = vadd.f32 %v375, %v381
    %384 = vst [vmem:[#allocation7] sm:$0x1] %v383
    // Predicated region
    $region18: #{tpu_custom_call.1} parent=1 // pred_check
      _
    $region19: #{tpu_custom_call.1} parent=1 // pred_check_branch
      %386 = sbr.rel (0) target = $region21
    $region20: #{tpu_custom_call.1} parent=1 // pred_region
      %s388 = ssub.s32 16, 16
      %389 = vsyncadd [#allocation4], %s388
      %s391 = sshll.u32 [#allocation7], 4
      %s392 = int_to_ptr.vmem [resolvable:$true] %s391
      %394 = dma.vmem_to_hbm [thread:$0]  %s392, 16, %s2, [#allocation4]
    $region21: #{tpu_custom_call.1} parent=1 // pred_fallthru
      _
    // Predicated region
    $region22: #{tpu_custom_call.1} parent=1 // pred_check
      _
    $region23: #{tpu_custom_call.1} parent=1 // pred_check_branch
      %396 = sbr.rel (0) target = $region25
    $region24: #{tpu_custom_call.1} parent=1 // pred_region
      %397 = dma.done [#allocation4], 16
    $region25: #{tpu_custom_call.1} parent=1 // pred_fallthru
      _
    %398 = vsyncpa [#allocation3], 1
    %399 = vsyncpa [#allocation6], 1
    %400 = vsyncpa [#allocation4], 1

</llo_original>
